<compile_context>
chip_gen: v7x
topology: tpu7x:2x2x1
jax: 0.10.0
libtpu: 0.0.40
codegen_flags: <defaults>
</compile_context>

<pallas_src>
import functools

import jax
import jax.numpy as jnp
from jax.experimental import pallas as pl
from jax.experimental.pallas import tpu as pltpu


def _round_up(x, m):
    return ((x + m - 1) // m) * m


def _cdiv(a, b):
    return (a + b - 1) // b


_MAX_UNTILED_K = 1024  # largest reduction handled as a single K block when W isn't resident


def _vmem_capacity_bytes():
    try:
        return int(pltpu.get_tpu_info().vmem_capacity_bytes)
    except Exception:
        return 64 << 20  # v7x floor; safe (if conservative) on every generation


def _plan_kn(K, N, w_itemsize, vmem_cap):
    """Decide K / N tiling. Returns (tk, tn, Kp, Np, w_resident)."""
    w_vmem_bytes = _round_up(K, 8) * _round_up(N, 128) * w_itemsize
    # Resident-weight fast path: W^T + bias stay in VMEM, K/N grid axes collapse.
    if w_vmem_bytes <= vmem_cap // 4:
        return K, N, K, N, True
    # Otherwise tile N lane-dense over a 128-padded N (padding done once, in prepare).
    Np = _round_up(N, 128)
    tn = 128
    for cand in (512, 256, 128):
        if Np % cand == 0:
            tn = cand
            break
    # Tile K only when genuinely large; then pad K up to the tile (zeros are
    # required so the ragged K-edge block contributes nothing to valid outputs).
    if K <= _MAX_UNTILED_K:
        tk, Kp = K, K
    else:
        tk = 512
        Kp = _round_up(K, tk)
    return tk, tn, Kp, Np, False


# ---------------------------------------------------------------------------
# Kernels
# ---------------------------------------------------------------------------

def _fused_kernel(x_ref, w_ref, b_ref, o_ref):
    # Whole reduction in one block: y = tanh(x @ W^T + b).
    x = x_ref[...].astype(w_ref.dtype)  # in-kernel cast -> bf16 MXU operands
    acc = jnp.dot(x, w_ref[...], preferred_element_type=jnp.float32)
    o_ref[...] = jnp.tanh(acc + b_ref[...]).astype(o_ref.dtype)


def _acc_out_kernel(x_ref, w_ref, b_ref, o_ref):
    # K tiled, f32 output: o_ref is resident across the K axis -> accumulate
    # straight into it (no scratch; frees VMEM for bigger tiles).
    k = pl.program_id(2)

    @pl.when(k == 0)
    def _():
        o_ref[...] = jnp.zeros_like(o_ref)

    x = x_ref[...].astype(w_ref.dtype)
    o_ref[...] += jnp.dot(x, w_ref[...], preferred_element_type=jnp.float32)

    @pl.when(k == pl.num_programs(2) - 1)
    def _():
        o_ref[...] = jnp.tanh(o_ref[...] + b_ref[...]).astype(o_ref.dtype)


def _acc_scratch_kernel(x_ref, w_ref, b_ref, o_ref, acc_ref):
    # K tiled, non-f32 output: f32 scratch accumulator, cast on the last step.
    k = pl.program_id(2)

    @pl.when(k == 0)
    def _():
        acc_ref[...] = jnp.zeros_like(acc_ref)

    x = x_ref[...].astype(w_ref.dtype)
    acc_ref[...] += jnp.dot(x, w_ref[...], preferred_element_type=jnp.float32)

    @pl.when(k == pl.num_programs(2) - 1)
    def _():
        o_ref[...] = jnp.tanh(acc_ref[...] + b_ref[...]).astype(o_ref.dtype)


# ---------------------------------------------------------------------------
# One-time parameter preparation (hoisted out of the per-call hot path)
# ---------------------------------------------------------------------------

def prepare_linear_tanh(weight, bias=None, *, compute_dtype=jnp.bfloat16):
    """Transform nn.Linear params once into the kernel-ready layout.

    weight: (out_ch, in_ch); bias: (out_ch,) or None.
    Returns (w_t, b2d):
      w_t : (Kp, Np) = weight.T, cast to compute_dtype, padded if K/N are tiled
      b2d : (1, Np) f32 bias row
    Do this once per layer; it is a full HBM pass over the weight that should
    not be paid on every forward call.
    """
    out_ch, in_ch = weight.shape
    if compute_dtype is None:
        compute_dtype = weight.dtype
    w_item = jnp.dtype(compute_dtype).itemsize
    _, _, Kp, Np, _ = _plan_kn(in_ch, out_ch, w_item, _vmem_capacity_bytes())

    w_t = weight.T.astype(compute_dtype)
    if (Kp, Np) != (in_ch, out_ch):
        w_t = jnp.pad(w_t, ((0, Kp - in_ch), (0, Np - out_ch)))

    if bias is None:
        bias = jnp.zeros((out_ch,), jnp.float32)
    b2d = bias.astype(jnp.float32).reshape(1, out_ch)
    if Np != out_ch:
        b2d = jnp.pad(b2d, ((0, 0), (0, Np - out_ch)))
    return w_t, b2d


# ---------------------------------------------------------------------------
# Hot path
# ---------------------------------------------------------------------------

@functools.partial(jax.jit, static_argnames=("in_ch", "out_ch"))
def linear_tanh_apply(x, w_t, b2d, *, in_ch, out_ch):
    """y = tanh(x.view(-1, in_ch) @ W^T + b) -> (M, out_ch).

    w_t / b2d come from prepare_linear_tanh (pre-transposed / cast / padded)."""
    x2d = x.reshape(-1, in_ch)
    M, K = x2d.shape
    N = out_ch
    out_dtype = x2d.dtype
    x_item = jnp.dtype(x2d.dtype).itemsize
    w_item = jnp.dtype(w_t.dtype).itemsize
    out_item = jnp.dtype(out_dtype).itemsize

    vmem_cap = _vmem_capacity_bytes()
    tk, tn, Kp, Np, _ = _plan_kn(K, N, w_item, vmem_cap)
    if tuple(w_t.shape) != (Kp, Np) or tuple(b2d.shape) != (1, Np):
        raise ValueError(
            f"prepared params {tuple(w_t.shape)}/{tuple(b2d.shape)} do not match "
            f"plan {(Kp, Np)} for in_ch={K}, out_ch={N}; rerun prepare_linear_tanh."
        )

    # K zero-pad only when the reduction axis is actually tiled and ragged.
    if Kp != K:
        x2d = jnp.pad(x2d, ((0, 0), (0, Kp - K)))

    # --- M tiling: big row tiles, NO M padding (ragged edge block is masked on
    # the output write) --------------------------------------------------------
    sub = {4: 8, 2: 16, 1: 32}.get(x_item, 8)  # sublane multiple of the stored x dtype
    tm = 1024 if vmem_cap >= (96 << 20) else 512  # v5e/v6e vs v7x default
    if M < tm:
        tm = max(_round_up(M, sub), sub)

    Ng = Np // tn
    Kg = Kp // tk
    # Expose >= 2 blocks on the parallel axes when M allows (v7x dual TensorCore).
    if _cdiv(M, tm) * Ng < 2 and M >= 2 * sub:
        tm = _round_up(_cdiv(M, 2), sub)

    use_scratch = (Kg > 1) and (out_dtype != jnp.float32)

    def _vmem_need(tm_):
        nb = 2 * _round_up(tm_, 8) * _round_up(tk, 128) * x_item       # x tiles (dbl buf)
        nb += 2 * _round_up(tk, 8) * _round_up(tn, 128) * w_item       # W^T tiles
        nb += 2 * 8 * _round_up(tn, 128) * 4                           # bias tile (f32)
        nb += 2 * _round_up(tm_, 8) * _round_up(tn, 128) * out_item    # out tiles
        if use_scratch:
            nb += _round_up(tm_, 8) * _round_up(tn, 128) * 4           # f32 accumulator
        return nb

    while _vmem_need(tm) > (vmem_cap * 8) // 10 and tm > sub:
        tm = max(_round_up(tm // 2, sub), sub)
    Mg = _cdiv(M, tm)

    need = _vmem_need(tm)
    vmem_limit = int(min(vmem_cap, max(need + (need >> 2), 16 << 20)))

    grid = (Mg, Ng, Kg)

    if Kg == 1:
        kernel = _fused_kernel
        scratch_shapes = []
    elif not use_scratch:
        kernel = _acc_out_kernel
        scratch_shapes = []
    else:
        kernel = _acc_scratch_kernel
        scratch_shapes = [pltpu.VMEM((tm, tn), jnp.float32)]

    cost = pl.CostEstimate(
        flops=2 * M * Kp * Np,
        transcendentals=M * Np,
        bytes_accessed=x_item * M * Kp + w_item * Kp * Np + out_item * M * Np,
    )

    out = pl.pallas_call(
        kernel,
        out_shape=jax.ShapeDtypeStruct((M, Np), out_dtype),
        grid=grid,
        in_specs=[
            pl.BlockSpec((tm, tk), lambda i, j, k: (i, k)),   # x row/K tile (x dtype)
            pl.BlockSpec((tk, tn), lambda i, j, k: (k, j)),   # W^T K/N tile (bf16)
            pl.BlockSpec((1, tn), lambda i, j, k: (0, j)),    # bias N tile (f32)
        ],
        out_specs=pl.BlockSpec((tm, tn), lambda i, j, k: (i, j)),
        scratch_shapes=scratch_shapes,
        compiler_params=pltpu.CompilerParams(
            dimension_semantics=("parallel", "parallel", "arbitrary"),
            vmem_limit_bytes=vmem_limit,
        ),
        cost_estimate=cost,
    )(x2d, w_t, b2d)

    if Np != N:  # only on the rare tiled, non-128-multiple out_ch path
        out = out[:, :N]
    return out


def linear_tanh(x, weight, bias=None, *, compute_dtype=jnp.bfloat16):
    """One-shot convenience: prepare + apply.  For repeated calls with the same
    layer, call prepare_linear_tanh once and reuse linear_tanh_apply."""
    out_ch, in_ch = weight.shape
    w_t, b2d = prepare_linear_tanh(weight, bias, compute_dtype=compute_dtype)
    return linear_tanh_apply(x, w_t, b2d, in_ch=in_ch, out_ch=out_ch)


if __name__ == "__main__":
    key = jax.random.PRNGKey(0)
    in_ch, out_ch = 32, 64
    kx, kw, kb, kx2 = jax.random.split(key, 4)

    # deterministic nn.Linear-style init: U(-1/sqrt(in_ch), 1/sqrt(in_ch))
    bound = 1.0 / (in_ch ** 0.5)
    weight = jax.random.uniform(kw, (out_ch, in_ch), jnp.float32, -bound, bound)
    bias = jax.random.uniform(kb, (out_ch,), jnp.float32, -bound, bound)

    # --- hot path: prepare once, apply per call (default bf16 MXU operands) ---
    w_t, b2d = prepare_linear_tanh(weight, bias)  # bf16 W^T, f32 bias, one-time

    # case 1: leading dims flatten to M = 16 (like x.view(-1, in_ch))
    x1 = jax.random.normal(kx, (2, 8, in_ch), dtype=jnp.float32)
    y1 = linear_tanh_apply(x1, w_t, b2d, in_ch=in_ch, out_ch=out_ch)
    jax.block_until_ready(y1)
    ref1 = jnp.tanh(x1.reshape(-1, in_ch) @ weight.T + bias)
    assert y1.shape == (16, out_ch)
    assert jnp.allclose(y1, ref1, atol=3e-2, rtol=3e-2), float(jnp.abs(y1 - ref1).max())

    # case 2: ragged M (= 15) exercises the un-padded edge-block path
    x2 = jax.random.normal(kx2, (3, 5, in_ch), dtype=jnp.float32)
    y2 = linear_tanh_apply(x2, w_t, b2d, in_ch=in_ch, out_ch=out_ch)
    jax.block_until_ready(y2)
    ref2 = jnp.tanh(x2.reshape(-1, in_ch) @ weight.T + bias)
    assert y2.shape == (15, out_ch)
    assert jnp.allclose(y2, ref2, atol=3e-2, rtol=3e-2), float(jnp.abs(y2 - ref2).max())

    # case 3: strict-f32 path (compute_dtype=None keeps f32 MXU operands)
    y3 = linear_tanh(x1, weight, bias, compute_dtype=None)
    jax.block_until_ready(y3)
    assert y3.shape == (16, out_ch)
    assert jnp.allclose(y3, ref1, atol=1e-5, rtol=1e-5), float(jnp.abs(y3 - ref1).max())

    print("KERNEL_OK")
</pallas_src>

<mosaic_0001>
module attributes {stable_mosaic.version = 11 : i64} {
  func.func @_fused_kernel(%arg0: i32, %arg1: i32, %arg2: i32, %arg3: memref<8x32xf32, #tpu.memory_space<vmem>>, %arg4: memref<32x64xbf16, #tpu.memory_space<vmem>>, %arg5: memref<1x64xf32, #tpu.memory_space<vmem>>, %arg6: memref<8x64xf32, #tpu.memory_space<vmem>>) attributes {dimension_semantics = [#tpu.dimension_semantics<parallel>, #tpu.dimension_semantics<parallel>, #tpu.dimension_semantics<arbitrary>], iteration_bounds = array<i64: 2, 1, 1>, scalar_prefetch = 0 : i64, scratch_operands = 0 : i64, tpu.core_type = #tpu.core_type<tc>, window_params = [{transform_indices = @transform_0, window_bounds = array<i64: 8, 32>}, {transform_indices = @transform_1, window_bounds = array<i64: 32, 64>}, {transform_indices = @transform_2, window_bounds = array<i64: 1, 64>}, {transform_indices = @transform_3, window_bounds = array<i64: 8, 64>}]} {
    %c0 = arith.constant 0 : index
    %c0_0 = arith.constant 0 : index
    %0 = vector.load %arg3[%c0, %c0_0] : memref<8x32xf32, #tpu.memory_space<vmem>>, vector<8x32xf32>
    %1 = arith.truncf %0 : vector<8x32xf32> to vector<8x32xbf16>
    %c0_1 = arith.constant 0 : index
    %c0_2 = arith.constant 0 : index
    %2 = vector.load %arg4[%c0_1, %c0_2] : memref<32x64xbf16, #tpu.memory_space<vmem>>, vector<32x64xbf16>
    %cst = arith.constant dense<0.000000e+00> : vector<8x64xf32>
    %3 = tpu.matmul %1, %2, %cst {dimension_numbers = #tpu.dot_dimension_numbers<[1], [0], [0], [1], [0, 0, 1, 1], [], []>} : vector<8x32xbf16>, vector<32x64xbf16>, vector<8x64xf32> -> vector<8x64xf32>
    %c0_3 = arith.constant 0 : index
    %c0_4 = arith.constant 0 : index
    %4 = vector.load %arg5[%c0_3, %c0_4] : memref<1x64xf32, #tpu.memory_space<vmem>>, vector<1x64xf32>
    %5 = vector.broadcast %4 : vector<1x64xf32> to vector<8x64xf32>
    %6 = arith.addf %3, %5 : vector<8x64xf32>
    %7 = math.tanh %6 : vector<8x64xf32>
    %c0_5 = arith.constant 0 : index
    %c0_6 = arith.constant 0 : index
    %8 = vector.load %arg6[%c0_5, %c0_6] : memref<8x64xf32, #tpu.memory_space<vmem>>, vector<8x64xf32>
    tpu.vector_store %arg6[%c0_5, %c0_6], %7 {strides = array<i32>} : memref<8x64xf32, #tpu.memory_space<vmem>>, vector<8x64xf32>,
    return
  }
  func.func @transform_0(%arg0: i32, %arg1: i32, %arg2: i32) -> (i32, i32) {
    %c0_i32 = arith.constant 0 : i32
    return %arg0, %arg2 : i32, i32
  }
  func.func @transform_1(%arg0: i32, %arg1: i32, %arg2: i32) -> (i32, i32) {
    %c0_i32 = arith.constant 0 : i32
    return %arg2, %arg1 : i32, i32
  }
  func.func @transform_2(%arg0: i32, %arg1: i32, %arg2: i32) -> (i32, i32) {
    %c0_i32 = arith.constant 0 : i32
    %c0_i32_0 = arith.constant 0 : i32
    return %c0_i32, %arg1 : i32, i32
  }
  func.func @transform_3(%arg0: i32, %arg1: i32, %arg2: i32) -> (i32, i32) {
    %c0_i32 = arith.constant 0 : i32
    return %arg0, %arg1 : i32, i32
  }
}

</mosaic_0001>

<llo_original>
// kernel: linear_tanh_apply.1
$region0: #{linear_tanh_apply.1}
  #allocation0 [shape = 'u32[]', space=smem, size = 0x4, offset = 0x4, fixed_abs, tag = 'smem constant byte address 0x4 - core index']
  #allocation1 [shape = 'u32[144,128]{1,0:T(1,128)}', space=vmem, size = 0x12000, scoped, tag = 'internal scratch']
  %s0 = inlined_call_operand.hbm [shape: f32[16,32], index: 0, kind: input, shape index: {}]
  %s1 = inlined_call_operand.hbm [shape: bf16[32,64], index: 1, kind: input, shape index: {}]
  %s2 = inlined_call_operand.vmem [shape: f32[1,64], index: 2, kind: input, shape index: {}]
  %s3 = inlined_call_operand.hbm [shape: f32[16,64], index: 3, kind: output, shape index: {}]
  %s4 = sld [smem:[#allocation0]]
  $region53: #{linear_tanh_apply.1} parent=0
    _
  %s6 = ssub.s32 1, %s4
  %s7 = scalar_select 0, %s6, %s4
  $region1: #{linear_tanh_apply.1} parent=0
    #allocation2 [shape = 'u8[8192]{0}', space=vmem, size = 0x2000, scoped, tag = 'input window, operand 0']
    #allocation3 [shape = 's32[2]{0}', space=sflag, size = 0x8, scoped, tag = 'scoped memory for linear_tanh_apply.1']
    #allocation4 [shape = 's32[2]{0}', space=sflag, size = 0x8, scoped, tag = 'scoped memory for linear_tanh_apply.1']
    #allocation5 [shape = 'u8[8192]{0}', space=vmem, size = 0x2000, scoped, tag = 'input window, operand 1, single buffered']
    #allocation6 [shape = 's32[1]{0}', space=sflag, size = 0x4, scoped, tag = 'scoped memory for linear_tanh_apply.1']
    #allocation7 [shape = 'u8[8192]{0}', space=vmem, size = 0x2000, scoped, tag = 'output window, operand 0']
    %8 = vsyncpa [#allocation3], 0
    %s9 = scalar_lea.sflag [#allocation3], 1
    %10 = vsyncpa %s9, 0
    %11 = vsyncpa [#allocation6], 0
    %12 = vsyncpa [#allocation4], 0
    %s13 = scalar_lea.sflag [#allocation4], 1
    %14 = vsyncpa %s13, 0
    loop: start=0, step=1, limit=4
    $region2: #{linear_tanh_apply.1} parent=1 // loop_pre_header
      _
    $region3: #{linear_tanh_apply.1} parent=1 // loop_header
      %s16 = sphi 0, %s20
      %p17 = scmp.ge.s32.totalorder %s16, 4
      %s23 = sphi 0, %s42
      %s24 = sphi 0, %s38
      %s25 = sphi 0, %s34
      %s26 = sphi 0, %s23
      %s27 = sphi 0, %s24
      %s28 = sphi 0, %s25
      %s29 = sphi 0, %s26
      %s30 = sphi 0, %s27
      %s31 = sphi 0, %s28
      %s47 = sphi 0, %s49
      %s50 = sphi 0, %s47
      %s51 = sphi 0, %s50
      %s67 = sphi 0, %s51
      %s75 = sphi 0, %s77
      %s78 = sphi 0, %s75
      %s79 = sphi 0, %s78
      %s95 = sphi 0, %s79
      %s101 = sphi 0, %s103
      %s104 = sphi 0, %s101
      %s105 = sphi 0, %s104
      %s121 = sphi 0, %s105
      %s129 = sphi 0, %s131
      %s132 = sphi 0, %s129
      %s133 = sphi 0, %s132
      %s149 = sphi 0, %s133
    $region4: #{linear_tanh_apply.1} parent=1 // loop_header_branch
      %19 = sbr.rel (%p17) target = $region8
    $region5: #{linear_tanh_apply.1} parent=1 // loop_body
      %s21 = ssub.s32 %s16, 1
      %s22 = ssub.s32 %s16, 2
      %s32 = sadd.s32 1, %s25
      %p33 = scmp.ge.s32.totalorder %s32, 1
      %s34 = scalar_select %p33, 0, %s32
      %s35 = sadd.s32 1, %s24
      %s36 = scalar_select %p33, %s35, %s24
      %p37 = scmp.ge.s32.totalorder %s36, 1
      %s38 = scalar_select %p37, 0, %s36
      %s39 = sadd.s32 1, %s23
      %s40 = scalar_select %p37, %s39, %s23
      %p41 = scmp.ge.s32.totalorder %s40, 2
      %s42 = scalar_select %p41, 0, %s40
      %s43 = ssub.s32 %s23, %s42
      %s44 = ssub.s32 %s25, %s34
      %s45 = sor.u32 %s43, %s44
      %p46 = scmp.eq.s32.totalorder %s45, 0
      %s48 = sadd.s32 %s47, 1
      %s49 = scalar_select %p46, %s47, %s48
      %p52 = pneg %p46
      %p53 = scmp.eq.s32.totalorder %s16, 1
      %p54 = por %p52, %p53
      %p55 = scmp.ne.s32.totalorder %s47, %s50
      %p56 = scmp.eq.s32.totalorder %s16, 0
      %p57 = por %p55, %p56
      %p58 = scmp.ne.s32.totalorder %s47, %s50
      %p59 = scmp.eq.s32.totalorder %s21, 1
      %p60 = por %p58, %p59
      %p61 = scmp.ne.s32.totalorder %s50, %s51
      %p62 = scmp.eq.s32.totalorder %s21, 0
      %p63 = por %p61, %p62
      %p64 = scmp.ne.s32.totalorder %s50, %s51
      %p65 = scmp.eq.s32.totalorder %s22, 1
      %p66 = por %p64, %p65
      %p68 = scmp.ne.s32.totalorder %s51, %s67
      %p69 = scmp.eq.s32.totalorder %s22, 0
      %p70 = por %p68, %p69
      %s71 = ssub.s32 %s25, %s34
      %s72 = ssub.s32 %s24, %s38
      %s73 = sor.u32 %s71, %s72
      %p74 = scmp.eq.s32.totalorder %s73, 0
      %s76 = sadd.s32 %s75, 1
      %s77 = scalar_select %p74, %s75, %s76
      %p80 = pneg %p74
      %p81 = scmp.eq.s32.totalorder %s16, 1
      %p82 = por %p80, %p81
      %p83 = scmp.ne.s32.totalorder %s75, %s78
      %p84 = scmp.eq.s32.totalorder %s16, 0
      %p85 = por %p83, %p84
      %p86 = scmp.ne.s32.totalorder %s75, %s78
      %p87 = scmp.eq.s32.totalorder %s21, 1
      %p88 = por %p86, %p87
      %p89 = scmp.ne.s32.totalorder %s78, %s79
      %p90 = scmp.eq.s32.totalorder %s21, 0
      %p91 = por %p89, %p90
      %p92 = scmp.ne.s32.totalorder %s78, %s79
      %p93 = scmp.eq.s32.totalorder %s22, 1
      %p94 = por %p92, %p93
      %p96 = scmp.ne.s32.totalorder %s79, %s95
      %p97 = scmp.eq.s32.totalorder %s22, 0
      %p98 = por %p96, %p97
      %s99 = ssub.s32 %s24, %s38
      %p100 = scmp.eq.s32.totalorder %s99, 0
      %s102 = sadd.s32 %s101, 1
      %s103 = scalar_select %p100, %s101, %s102
      %p106 = pneg %p100
      %p107 = scmp.eq.s32.totalorder %s16, 1
      %p108 = por %p106, %p107
      %p109 = scmp.ne.s32.totalorder %s101, %s104
      %p110 = scmp.eq.s32.totalorder %s16, 0
      %p111 = por %p109, %p110
      %p112 = scmp.ne.s32.totalorder %s101, %s104
      %p113 = scmp.eq.s32.totalorder %s21, 1
      %p114 = por %p112, %p113
      %p115 = scmp.ne.s32.totalorder %s104, %s105
      %p116 = scmp.eq.s32.totalorder %s21, 0
      %p117 = por %p115, %p116
      %p118 = scmp.ne.s32.totalorder %s104, %s105
      %p119 = scmp.eq.s32.totalorder %s22, 1
      %p120 = por %p118, %p119
      %p122 = scmp.ne.s32.totalorder %s105, %s121
      %p123 = scmp.eq.s32.totalorder %s22, 0
      %p124 = por %p122, %p123
      %s125 = ssub.s32 %s23, %s42
      %s126 = ssub.s32 %s24, %s38
      %s127 = sor.u32 %s125, %s126
      %p128 = scmp.eq.s32.totalorder %s127, 0
      %s130 = sadd.s32 %s129, 1
      %s131 = scalar_select %p128, %s129, %s130
      %p134 = pneg %p128
      %p135 = scmp.eq.s32.totalorder %s16, 1
      %p136 = por %p134, %p135
      %p137 = scmp.ne.s32.totalorder %s129, %s132
      %p138 = scmp.eq.s32.totalorder %s16, 0
      %p139 = por %p137, %p138
      %p140 = scmp.ne.s32.totalorder %s129, %s132
      %p141 = scmp.eq.s32.totalorder %s21, 1
      %p142 = por %p140, %p141
      %p143 = scmp.ne.s32.totalorder %s132, %s133
      %p144 = scmp.eq.s32.totalorder %s21, 0
      %p145 = por %p143, %p144
      %p146 = scmp.ne.s32.totalorder %s132, %s133
      %p147 = scmp.eq.s32.totalorder %s22, 1
      %p148 = por %p146, %p147
      %p150 = scmp.ne.s32.totalorder %s133, %s149
      %p151 = scmp.eq.s32.totalorder %s22, 0
      %p152 = por %p150, %p151
      %p153 = scmp.le.s32.totalorder 1, %s16
      %p154 = scmp.lt.s32.totalorder %s16, 3
      %p155 = pnand %p153, %p154
      %p156 = pneg %p155
      // Predicated region
      $region9: #{linear_tanh_apply.1} parent=5 // pred_check
        _
      $region10: #{linear_tanh_apply.1} parent=5 // pred_check_branch
        %158 = sbr.rel (%p155) target = $region12
      $region11: #{linear_tanh_apply.1} parent=5 // pred_region
        %s159 = ssub.s32 %s16, 1
        // Predicated region
        $region13: #{linear_tanh_apply.1} parent=11 // pred_check
          %p160 = pneg %p91
        $region14: #{linear_tanh_apply.1} parent=11 // pred_check_branch
          %162 = sbr.rel (%p160) target = $region16
        $region15: #{linear_tanh_apply.1} parent=11 // pred_region
          %s163 = smul.u32 4, %s28
          %s165 = ssub.s32 256, 256
          %166 = vsyncadd [#allocation6], %s165
          %s167 = sadd.s32 %s27, %s163
          %s168 = smul.addr %s167, 64
          %s169 = scalar_lea.hbm %s1, %s168
          %s170 = sshll.u32 [#allocation5], 4
          %s171 = int_to_ptr.vmem [resolvable:$true] %s170
          %176 = dma.hbm_to_vmem [thread:$0]  %s169, 256, %s171, [#allocation6], 64, 64, 4
        $region16: #{linear_tanh_apply.1} parent=11 // pred_fallthru
          _
        // Predicated region
        $region17: #{linear_tanh_apply.1} parent=11 // pred_check
          %p177 = pneg %p117
        $region18: #{linear_tanh_apply.1} parent=11 // pred_check_branch
          %179 = sbr.rel (%p177) target = $region20
        $region19: #{linear_tanh_apply.1} parent=11 // pred_region
          %p180 = scmp.lt.s32.totalorder %s27, 0
          %s181 = scalar_select %p180, %s27, 0
          %s182 = scalar_lea.vmem %s2, %s181
        $region20: #{linear_tanh_apply.1} parent=11 // pred_fallthru
          _
      $region12: #{linear_tanh_apply.1} parent=5 // pred_fallthru
        _
      %p183 = scmp.lt.s32.totalorder %s16, 2
      // Predicated region
      $region21: #{linear_tanh_apply.1} parent=5 // pred_check
        %p184 = pneg %p183
      $region22: #{linear_tanh_apply.1} parent=5 // pred_check_branch
        %186 = sbr.rel (%p184) target = $region24
      $region23: #{linear_tanh_apply.1} parent=5 // pred_region
        // Predicated region
        $region25: #{linear_tanh_apply.1} parent=23 // pred_check
          %p187 = pneg %p57
        $region26: #{linear_tanh_apply.1} parent=23 // pred_check_branch
          %189 = sbr.rel (%p187) target = $region28
        $region27: #{linear_tanh_apply.1} parent=23 // pred_region
          %s190 = sand.u32 %s47, 1
          %s191 = scalar_lea.sflag [#allocation3], %s190
          %s192 = sand.u32 %s47, 1
          %s193 = smul.addr %s192, 8
          %s194 = scalar_lea.vmem [#allocation2], %s193
          %s196 = ssub.s32 128, 128
          %197 = vsyncadd %s191, %s196
          %s198 = sadd.s32 %s25, %s23
          %s199 = smul.addr %s198, 128
          %s200 = scalar_lea.hbm %s0, %s199
          %s202 = sshll.u32 %s194, 4
          %s203 = int_to_ptr.vmem [resolvable:$true] %s202
          %205 = dma.hbm_to_vmem [thread:$0]  %s200, 128, %s203, %s191
        $region28: #{linear_tanh_apply.1} parent=23 // pred_fallthru
          _
      $region24: #{linear_tanh_apply.1} parent=5 // pred_fallthru
        _
      %p206 = scmp.le.s32.totalorder 1, %s16
      %p207 = scmp.lt.s32.totalorder %s16, 3
      %p208 = pnand %p206, %p207
      %p209 = pneg %p208
      // Predicated region
      $region29: #{linear_tanh_apply.1} parent=5 // pred_check
        _
      $region30: #{linear_tanh_apply.1} parent=5 // pred_check_branch
        %211 = sbr.rel (%p208) target = $region32
      $region31: #{linear_tanh_apply.1} parent=5 // pred_region
        %s212 = ssub.s32 %s16, 1
        %s213 = sand.u32 %s50, 1
        %s214 = scalar_lea.sflag [#allocation3], %s213
        %s215 = sand.u32 %s50, 1
        %s216 = smul.addr %s215, 8
        %s217 = scalar_lea.vmem [#allocation2], %s216
        // Predicated region
        $region33: #{linear_tanh_apply.1} parent=31 // pred_check
          %p218 = pneg %p63
        $region34: #{linear_tanh_apply.1} parent=31 // pred_check_branch
          %220 = sbr.rel (%p218) target = $region36
        $region35: #{linear_tanh_apply.1} parent=31 // pred_region
          %221 = dma.done %s214, 128
        $region36: #{linear_tanh_apply.1} parent=31 // pred_fallthru
          _
        // Predicated region
        $region37: #{linear_tanh_apply.1} parent=31 // pred_check
          %p222 = pneg %p91
        $region38: #{linear_tanh_apply.1} parent=31 // pred_check_branch
          %224 = sbr.rel (%p222) target = $region40
        $region39: #{linear_tanh_apply.1} parent=31 // pred_region
          %225 = dma.done [#allocation6], 256
        $region40: #{linear_tanh_apply.1} parent=31 // pred_fallthru
          _
        %s226 = sand.u32 %s50, 1
        %s227 = scalar_lea.sflag [#allocation3], %s226
        %s228 = sand.u32 %s50, 1
        %s229 = smul.addr %s228, 8
        %s230 = scalar_lea.vmem [#allocation2], %s229
        %p231 = pneg %p63
        %p232 = pneg %p60
        %p233 = pneg %p91
        %p234 = pneg %p88
        %p235 = scmp.lt.s32.totalorder %s27, 0
        %s236 = scalar_select %p235, %s27, 0
        %s237 = scalar_lea.vmem %s2, %s236
        %p238 = pneg %p117
        %p239 = pneg %p114
        %p240 = pneg %p145
        %p241 = pneg %p142
        %s242 = sand.u32 %s132, 1
        %s243 = scalar_lea.sflag [#allocation4], %s242
        %s244 = sand.u32 %s132, 1
        %s245 = smul.addr %s244, 8
        %s246 = scalar_lea.vmem [#allocation7], %s245
        %s247 = smul.u32 4, %s28
        %p248 = scmp.lt.s32.totalorder %s27, 0
        %s249 = scalar_select %p248, %s27, 0
        %s250 = scalar_lea.vmem %s2, %s249
        %v252 = vld [vmem:[%s217] sm:$0xff]
        %v253 = vpack.c.bf16 %v252, %v252
        %v254 = vld [vmem:[#allocation5] sm:$0xf]
        %v255 = vld [vmem:[#allocation5 + $0x4] sm:$0xf]
        %v256 = vld [vmem:[#allocation5 + $0x8] sm:$0xf]
        %v257 = vld [vmem:[#allocation5 + $0xc] sm:$0xf]
        %v258 = vld [vmem:[%s250] sm:$0x1]
        %v260 = vlaneseq
        %v261 = vshrl.u32 %v260, 7
        %v262 = vsub.s32 0, %v261
        %v263 = vrot.slane %v258, %v262
        %v269 = vunpack.c.l.b16 %v254
        %v270 = vunpack.c.l.b16 %v255
        %v271 = vunpack.c.l.b16 %v256
        %v272 = vunpack.c.l.b16 %v257
        %v273 = vpack.c.b16 %v270, %v269
        %v274 = vpack.c.b16 %v272, %v271
        %vm277 = vcmask 261120
        %v279 = vsel %vm277, %v253, 0
        %281 = vmatprep.subr.bf16.mxu0 0
        %282 = vmatpush1.bf16.msra.mxu0 %v273
        %283 = vmatprep.subr.bf16.mxu0 0
        %284 = vmatpush1.bf16.msra.mxu0 %v274
        %285 = vmatprep.subr.bf16.mxu0 0
        %286 = vmatpush1.bf16.msra.mxu0 0
        %287 = vmatprep.subr.bf16.mxu0 0
        %288 = vmatpush1.bf16.msra.mxu0 0
        %289 = vmatprep.subr.bf16.mxu0 0
        %290 = vmatpush1.bf16.msra.mxu0 0
        %291 = vmatprep.subr.bf16.mxu0 0
        %292 = vmatpush1.bf16.msra.mxu0 0
        %293 = vmatprep.subr.bf16.mxu0 0
        %294 = vmatpush1.bf16.msra.mxu0 0
        %295 = vmatprep.subr.bf16.mxu0 0
        %296 = vmatpush1.bf16.msra.mxu0 0
        %297 = vmatprep.subr.bf16.mxu0 0
        %298 = vmatpush1.bf16.msra.mxu0 0
        %299 = vmatprep.subr.bf16.mxu0 0
        %300 = vmatpush1.bf16.msra.mxu0 0
        %301 = vmatprep.subr.bf16.mxu0 0
        %302 = vmatpush1.bf16.msra.mxu0 0
        %303 = vmatprep.subr.bf16.mxu0 0
        %304 = vmatpush1.bf16.msra.mxu0 0
        %305 = vmatprep.subr.bf16.mxu0 0
        %306 = vmatpush1.bf16.msra.mxu0 0
        %307 = vmatprep.subr.bf16.mxu0 0
        %308 = vmatpush1.bf16.msra.mxu0 0
        %309 = vmatprep.subr.bf16.mxu0 0
        %310 = vmatpush1.bf16.msra.mxu0 0
        %311 = vmatprep.subr.bf16.mxu0 0
        %312 = vmatpush1.bf16.msra.mxu0 0
        %313 = vmatprep.mubr.bf16.mxu0 0
        %314 = vmatmul.mubr.bf16.gmra.mrb[0].mxu0 %v279
        %v315 = vpop.f32.mrb[0].mxu0
        %v316 = vadd.f32 %v263, %v315
        %v317 = vpop.f32.mrb[0].mxu0
        %v318 = vpop.f32.mrb[0].mxu0
        %v319 = vpop.f32.mrb[0].mxu0
        %320 = vdwg.mxu0
        %v321 = vtanh.pop %v316
        %vm322 = vcmask 523264
        %323 = vst.msk [vmem:[%s246] sm:$0xff] %vm322, %v321
        %s324 = sand.u32 %s132, 1
        %s325 = scalar_lea.sflag [#allocation4], %s324
        %s326 = sand.u32 %s132, 1
        %s327 = smul.addr %s326, 8
        %s328 = scalar_lea.vmem [#allocation7], %s327
        // Predicated region
        $region41: #{linear_tanh_apply.1} parent=31 // pred_check
          %p329 = pneg %p142
        $region42: #{linear_tanh_apply.1} parent=31 // pred_check_branch
          %331 = sbr.rel (%p329) target = $region44
        $region43: #{linear_tanh_apply.1} parent=31 // pred_region
          %s333 = ssub.s32 128, 128
          %334 = vsyncadd %s325, %s333
          %s335 = sadd.s32 %s27, %s26
          %s336 = smul.addr %s335, 128
          %s337 = scalar_lea.hbm %s3, %s336
          %s339 = sshll.u32 %s328, 4
          %s340 = int_to_ptr.vmem [resolvable:$true] %s339
          %342 = dma.vmem_to_hbm [thread:$0]  %s340, 128, %s337, %s325
        $region44: #{linear_tanh_apply.1} parent=31 // pred_fallthru
          _
      $region32: #{linear_tanh_apply.1} parent=5 // pred_fallthru
        _
      %p343 = scmp.le.s32.totalorder 2, %s16
      // Predicated region
      $region45: #{linear_tanh_apply.1} parent=5 // pred_check
        %p344 = pneg %p343
      $region46: #{linear_tanh_apply.1} parent=5 // pred_check_branch
        %346 = sbr.rel (%p344) target = $region48
      $region47: #{linear_tanh_apply.1} parent=5 // pred_region
        %s347 = ssub.s32 %s16, 2
        // Predicated region
        $region49: #{linear_tanh_apply.1} parent=47 // pred_check
          %p348 = pneg %p148
        $region50: #{linear_tanh_apply.1} parent=47 // pred_check_branch
          %350 = sbr.rel (%p348) target = $region52
        $region51: #{linear_tanh_apply.1} parent=47 // pred_region
          %s351 = sand.u32 %s133, 1
          %s352 = scalar_lea.sflag [#allocation4], %s351
          %s353 = sand.u32 %s133, 1
          %s354 = smul.addr %s353, 8
          %s355 = scalar_lea.vmem [#allocation7], %s354
          %356 = dma.done %s352, 128
        $region52: #{linear_tanh_apply.1} parent=47 // pred_fallthru
          _
      $region48: #{linear_tanh_apply.1} parent=5 // pred_fallthru
        _
    $region6: #{linear_tanh_apply.1} parent=1 // loop_footer
      %s20 = sadd.s32 1, %s16
    $region7: #{linear_tanh_apply.1} parent=1 // loop_footer_branch
      %15 = sbr.rel target = $region3
    $region8: #{linear_tanh_apply.1} parent=1 // loop_exit
      _
    %357 = vsyncpa [#allocation3], 1
    %s358 = scalar_lea.sflag [#allocation3], 1
    %359 = vsyncpa %s358, 1
    %360 = vsyncpa [#allocation6], 1
    %361 = vsyncpa [#allocation4], 1
    %s362 = scalar_lea.sflag [#allocation4], 1
    %363 = vsyncpa %s362, 1

</llo_original>
